<compile_context>
chip_gen: v6e
topology: v6e:2x2x1
jax: 0.10.0
libtpu: 0.0.40
codegen_flags: <defaults>
</compile_context>

<pallas_src>
import numpy as np
import jax
import jax.numpy as jnp
from jax.experimental import pallas as pl
from jax.experimental.pallas import tpu as pltpu

# fixed seasonal periods (years) — compile-time constants, mirroring the
# registered buffer `fixed_periods` = [0.25, 0.5, 1.0]
FIXED_PERIODS = (0.25, 0.5, 1.0)
TWO_PI = 2.0 * np.pi
_N_BASIS = 8    # basis rows: [t, sin1, cos1, sin2, cos2, sin3, cos3, 0]
_N_COEFF = 16   # coeff cols: [trend, cs1, cc1, cs2, cc2, cs3, cc3, 0,
                #              2*pi/long_period, amp3, ph3, 0, 0, 0, 0, 0]


def _cdiv(a, b):
    return -(-a // b)


def _round_up(x, m):
    return _cdiv(x, m) * m


def _balanced_tiles(extent, quantum, max_tile):
    """Split `extent` into equal quantum-aligned tiles no larger than ~max_tile.

    Returns (n_blocks, tile) with n_blocks * tile >= extent and padding waste
    bounded by < n_blocks * quantum (instead of up to a whole fixed tile)."""
    padded = _round_up(extent, quantum)
    cap = max(quantum, _round_up(min(max_tile, padded), quantum))
    n_blocks = _cdiv(padded, cap)
    tile = _round_up(_cdiv(extent, n_blocks), quantum)
    return n_blocks, tile


def insar_forward_kernel(basis_ref, coeff_ref, out_ref):
    """One (TS, TT) tile of the InSAR signal synthesis.

    basis_ref : (8, TT)   time basis rows [t, sin1, cos1, sin2, cos2, sin3, cos3, 0]
    coeff_ref : (TS, 16)  per-station packed coefficients (see _N_COEFF layout)
    out_ref   : (TS, TT)  synthesized signals
    """
    basis = basis_ref[...]                       # (8, TT)
    coeff = coeff_ref[...]                       # (TS, 16)

    # trend + 3 fixed-period seasonals via angle-addition identity,
    #   amp*sin(w*t + p) = (amp*cos p)*sin(w*t) + (amp*sin p)*cos(w*t),
    # folded into a single MXU matmul (K = 8, zero-padded). No VALU FMAs,
    # no transcendentals on the (TS, TT) tile for these terms.
    signals = jnp.dot(coeff[:, 0:8], basis, preferred_element_type=jnp.float32)

    # long-period component (per-station learnable period): the only full-tile sin.
    # TODO(synk): for uniformly sampled time vectors this sin could be replaced by
    # a coarse/fine angle-addition (per-128-lane-group sin/cos) to cut EUP/VALU
    # transcendental work by ~4-8x; kept as a plain sin for robustness.
    t_row = basis[0:1, :]                        # (1, TT) time row
    w    = coeff[:, 8:9]                         # (TS, 1)  2*pi / long_period
    amp3 = coeff[:, 9:10]                        # (TS, 1)
    ph3  = coeff[:, 10:11]                       # (TS, 1)
    signals = signals + amp3 * jnp.sin(w * t_row + ph3)

    out_ref[...] = signals


def insar_forward(time_vector, linear_trend, seasonal_amplitudes, seasonal_phases,
                  long_period, *, station_tile=512, time_tile=2048):
    """Pallas wrapper. Returns signals of shape [n_stations, n_timepoints] (f32)."""
    n_stations = int(linear_trend.shape[0])
    n_timepoints = int(time_vector.shape[0])
    f32 = jnp.float32

    # --- adaptive, balanced tile sizes ((8,128)-aligned, minimal padding waste) ---
    n_sblk, ts = _balanced_tiles(n_stations, 8, station_tile)
    n_tblk, tt = _balanced_tiles(n_timepoints, 128, time_tile)
    # v7x megacore: avoid a degenerate 1x1 grid when the problem can be split,
    # so both TensorCores get work.  No effect on v5e/v6e (single TC).
    if n_sblk * n_tblk == 1:
        if _round_up(n_timepoints, 128) >= 256:
            n_tblk, tt = _balanced_tiles(
                n_timepoints, 128, _round_up(_cdiv(n_timepoints, 2), 128))
        elif _round_up(n_stations, 8) >= 16:
            n_sblk, ts = _balanced_tiles(
                n_stations, 8, _round_up(_cdiv(n_stations, 2), 8))
    s_pad = n_sblk * ts
    t_pad = n_tblk * tt

    # --- tiny precompute: time basis (8, t_pad), shared by all stations.
    # Done in float64 so high-frequency sin/cos rows match the f64 reference
    # even for multi-decade time vectors; result cast to f32 (it is tiny).
    t64 = np.asarray(jax.device_get(time_vector), dtype=np.float64)
    t64 = np.pad(t64, (0, t_pad - n_timepoints))
    rows = [t64]
    for period in FIXED_PERIODS:
        ang = (TWO_PI / period) * t64
        rows.append(np.sin(ang))
        rows.append(np.cos(ang))
    rows.append(np.zeros_like(t64))
    basis = jnp.asarray(np.stack(rows, axis=0), dtype=f32)          # (8, t_pad)

    # --- tiny XLA precompute: per-station packed coefficients (S, 16) ---
    amps = seasonal_amplitudes.astype(f32)
    phs = seasonal_phases.astype(f32)
    cols = [linear_trend.astype(f32)]
    for i in range(3):
        cols.append(amps[:, i] * jnp.cos(phs[:, i]))                # multiplies sin(w_i t)
        cols.append(amps[:, i] * jnp.sin(phs[:, i]))                # multiplies cos(w_i t)
    cols.append(jnp.zeros((n_stations,), f32))                      # pad -> K = 8 matmul
    cols.append(TWO_PI / long_period.astype(f32))                   # col 8: w
    cols.append(amps[:, 3])                                         # col 9: amp3
    cols.append(phs[:, 3])                                          # col 10: ph3
    coeff = jnp.stack(cols, axis=1)                                 # (S, 11)
    coeff = jnp.pad(coeff, ((0, s_pad - n_stations),
                            (0, _N_COEFF - coeff.shape[1])))        # (s_pad, 16)
    # padded stations are all-zero rows -> output row 0 (sliced off below).

    grid = (n_sblk, n_tblk)   # time axis innermost: coeff block stays resident per row

    out = pl.pallas_call(
        insar_forward_kernel,
        out_shape=jax.ShapeDtypeStruct((s_pad, t_pad), f32),
        grid_spec=pltpu.PrefetchScalarGridSpec(
            num_scalar_prefetch=0,
            grid=grid,
            in_specs=[
                pl.BlockSpec((_N_BASIS, tt), lambda i, j: (0, j)),   # shared time basis
                pl.BlockSpec((ts, _N_COEFF), lambda i, j: (i, 0)),   # packed coeffs
            ],
            out_specs=pl.BlockSpec((ts, tt), lambda i, j: (i, j)),
        ),
        compiler_params=pltpu.CompilerParams(
            dimension_semantics=("parallel", "parallel")),
    )(basis, coeff)

    # skip the slice copy entirely when extents were already tile-aligned
    if s_pad == n_stations and t_pad == n_timepoints:
        return out
    return out[:n_stations, :n_timepoints]


def insar_forward_ref(time_vector, linear_trend, seasonal_amplitudes, seasonal_phases,
                      long_period):
    """Float64 numpy reference mirroring the PyTorch forward exactly."""
    t = np.asarray(time_vector, np.float64)[None, :]
    trend = np.asarray(linear_trend, np.float64)[:, None]
    amps = np.asarray(seasonal_amplitudes, np.float64)
    phs = np.asarray(seasonal_phases, np.float64)
    lp = np.asarray(long_period, np.float64)[:, None]
    signals = trend * t
    for i, period in enumerate(FIXED_PERIODS):
        signals = signals + amps[:, i:i + 1] * np.sin(TWO_PI * (1.0 / period) * t + phs[:, i:i + 1])
    signals = signals + amps[:, 3:4] * np.sin(TWO_PI / lp * t + phs[:, 3:4])
    return signals

# TODO(synk): add_noise() (training-mode randn + conv1d smoothing) and
# apply_constraints() are not part of the eval-mode forward implemented here.


if __name__ == "__main__":
    n_stations = 12     # not a multiple of 8  -> exercises station padding
    n_timepoints = 200  # not a multiple of 128 -> exercises lane padding + 2-block grid

    key = jax.random.PRNGKey(0)

    # deterministic parameter init, following InSARSignalModel.__init__:
    linear_trend = jnp.zeros((n_stations,), dtype=jnp.float32)
    seasonal_amplitudes = jnp.ones((n_stations, 4), dtype=jnp.float32) * 2.0
    seasonal_phases = jax.random.uniform(key, (n_stations, 4), dtype=jnp.float32) * TWO_PI
    long_period = jnp.ones((n_stations,), dtype=jnp.float32) * 2.0

    # time vector in years
    time_vector = jnp.linspace(0.0, 5.0, n_timepoints, dtype=jnp.float32)

    out = insar_forward(time_vector, linear_trend, seasonal_amplitudes,
                        seasonal_phases, long_period)
    out = jax.block_until_ready(out)

    ref = insar_forward_ref(time_vector, linear_trend, seasonal_amplitudes,
                            seasonal_phases, long_period)
    assert out.shape == (n_stations, n_timepoints)
    np.testing.assert_allclose(np.asarray(out), ref, rtol=2e-4, atol=2e-4)

    print("KERNEL_OK")
</pallas_src>

<mosaic_0001>
module attributes {stable_mosaic.version = 11 : i64} {
  func.func @insar_forward_kernel(%arg0: i32, %arg1: i32, %arg2: memref<8x128xf32, #tpu.memory_space<vmem>>, %arg3: memref<16x16xf32, #tpu.memory_space<vmem>>, %arg4: memref<16x128xf32, #tpu.memory_space<vmem>>) attributes {dimension_semantics = [#tpu.dimension_semantics<parallel>, #tpu.dimension_semantics<parallel>], iteration_bounds = array<i64: 1, 2>, scalar_prefetch = 0 : i64, scratch_operands = 0 : i64, tpu.core_type = #tpu.core_type<tc>, window_params = [{transform_indices = @transform_0, window_bounds = array<i64: 8, 128>}, {transform_indices = @transform_1, window_bounds = array<i64: 16, 16>}, {transform_indices = @transform_2, window_bounds = array<i64: 16, 128>}]} {
    %c0 = arith.constant 0 : index
    %c0_0 = arith.constant 0 : index
    %0 = vector.load %arg2[%c0, %c0_0] : memref<8x128xf32, #tpu.memory_space<vmem>>, vector<8x128xf32>
    %c0_1 = arith.constant 0 : index
    %c0_2 = arith.constant 0 : index
    %1 = vector.load %arg3[%c0_1, %c0_2] : memref<16x16xf32, #tpu.memory_space<vmem>>, vector<16x16xf32>
    %2 = vector.extract_strided_slice %1 {offsets = [0, 0], sizes = [16, 8], strides = [1, 1]} : vector<16x16xf32> to vector<16x8xf32>
    %cst = arith.constant dense<0.000000e+00> : vector<16x128xf32>
    %3 = tpu.matmul %2, %0, %cst {dimension_numbers = #tpu.dot_dimension_numbers<[1], [0], [0], [1], [0, 0, 1, 1], [], []>} : vector<16x8xf32>, vector<8x128xf32>, vector<16x128xf32> -> vector<16x128xf32>
    %4 = vector.extract_strided_slice %0 {offsets = [0, 0], sizes = [1, 128], strides = [1, 1]} : vector<8x128xf32> to vector<1x128xf32>
    %5 = vector.extract_strided_slice %1 {offsets = [0, 8], sizes = [16, 1], strides = [1, 1]} : vector<16x16xf32> to vector<16x1xf32>
    %6 = vector.extract_strided_slice %1 {offsets = [0, 9], sizes = [16, 1], strides = [1, 1]} : vector<16x16xf32> to vector<16x1xf32>
    %7 = vector.extract_strided_slice %1 {offsets = [0, 10], sizes = [16, 1], strides = [1, 1]} : vector<16x16xf32> to vector<16x1xf32>
    %8 = vector.broadcast %5 : vector<16x1xf32> to vector<16x128xf32>
    %9 = vector.broadcast %4 : vector<1x128xf32> to vector<16x128xf32>
    %10 = arith.mulf %8, %9 : vector<16x128xf32>
    %11 = vector.broadcast %7 : vector<16x1xf32> to vector<16x128xf32>
    %12 = arith.addf %10, %11 : vector<16x128xf32>
    %13 = math.sin %12 : vector<16x128xf32>
    %14 = vector.broadcast %6 : vector<16x1xf32> to vector<16x128xf32>
    %15 = arith.mulf %14, %13 : vector<16x128xf32>
    %16 = arith.addf %3, %15 : vector<16x128xf32>
    %c0_3 = arith.constant 0 : index
    %c0_4 = arith.constant 0 : index
    %17 = vector.load %arg4[%c0_3, %c0_4] : memref<16x128xf32, #tpu.memory_space<vmem>>, vector<16x128xf32>
    tpu.vector_store %arg4[%c0_3, %c0_4], %16 {strides = array<i32>} : memref<16x128xf32, #tpu.memory_space<vmem>>, vector<16x128xf32>,
    return
  }
  func.func @transform_0(%arg0: i32, %arg1: i32) -> (i32, i32) {
    %c0_i32 = arith.constant 0 : i32
    %c0_i32_0 = arith.constant 0 : i32
    return %c0_i32, %arg1 : i32, i32
  }
  func.func @transform_1(%arg0: i32, %arg1: i32) -> (i32, i32) {
    %c0_i32 = arith.constant 0 : i32
    %c0_i32_0 = arith.constant 0 : i32
    return %arg0, %c0_i32 : i32, i32
  }
  func.func @transform_2(%arg0: i32, %arg1: i32) -> (i32, i32) {
    %c0_i32 = arith.constant 0 : i32
    return %arg0, %arg1 : i32, i32
  }
}

</mosaic_0001>

<llo_original>
// kernel: tpu_custom_call.1
$region0: #{tpu_custom_call.1}
  #allocation0 [shape = 'u32[]', space=smem, size = 0x4, offset = 0x4, fixed_abs, tag = 'smem constant byte address 0x4 - core index']
  #allocation1 [shape = 'u32[144,128]{1,0:T(1,128)}', space=vmem, size = 0x12000, scoped, tag = 'internal scratch']
  %s0 = inlined_call_operand.hbm [shape: f32[8,256], index: 0, kind: input, shape index: {}]
  %s1 = inlined_call_operand.hbm [shape: f32[16,16], index: 1, kind: input, shape index: {}]
  %s2 = inlined_call_operand.hbm [shape: f32[16,256], index: 2, kind: output, shape index: {}]
  %s3 = sld [smem:[#allocation0]]
  $region49: #{tpu_custom_call.1} parent=0
    _
  %s5 = ssub.s32 1, %s3
  %s6 = scalar_select 0, %s5, %s3
  $region1: #{tpu_custom_call.1} parent=0
    #allocation2 [shape = 'u8[8192]{0}', space=vmem, size = 0x2000, scoped, tag = 'input window, operand 0']
    #allocation3 [shape = 's32[2]{0}', space=sflag, size = 0x8, scoped, tag = 'scoped memory for tpu_custom_call.1']
    #allocation4 [shape = 's32[2]{0}', space=sflag, size = 0x8, scoped, tag = 'scoped memory for tpu_custom_call.1']
    #allocation5 [shape = 'u8[8192]{0}', space=vmem, size = 0x2000, scoped, tag = 'input window, operand 1, single buffered']
    #allocation6 [shape = 's32[1]{0}', space=sflag, size = 0x4, scoped, tag = 'scoped memory for tpu_custom_call.1']
    #allocation7 [shape = 'u8[16384]{0}', space=vmem, size = 0x4000, scoped, tag = 'output window, operand 0']
    %7 = vsyncpa [#allocation3], 0
    %s8 = scalar_lea.sflag [#allocation3], 1
    %9 = vsyncpa %s8, 0
    %10 = vsyncpa [#allocation6], 0
    %11 = vsyncpa [#allocation4], 0
    %s12 = scalar_lea.sflag [#allocation4], 1
    %13 = vsyncpa %s12, 0
    loop: start=0, step=1, limit=4
    $region2: #{tpu_custom_call.1} parent=1 // loop_pre_header
      _
    $region3: #{tpu_custom_call.1} parent=1 // loop_header
      %s15 = sphi 0, %s19
      %p16 = scmp.ge.s32.totalorder %s15, 4
      %s22 = sphi 0, %s34
      %s23 = sphi 0, %s30
      %s24 = sphi 0, %s22
      %s25 = sphi 0, %s23
      %s26 = sphi 0, %s24
      %s27 = sphi 0, %s25
      %s37 = sphi 0, %s39
      %s40 = sphi 0, %s37
      %s41 = sphi 0, %s40
      %s57 = sphi 0, %s41
      %s63 = sphi 0, %s65
      %s66 = sphi 0, %s63
      %s67 = sphi 0, %s66
      %s83 = sphi 0, %s67
      %s91 = sphi 0, %s93
      %s94 = sphi 0, %s91
      %s95 = sphi 0, %s94
      %s111 = sphi 0, %s95
    $region4: #{tpu_custom_call.1} parent=1 // loop_header_branch
      %18 = sbr.rel (%p16) target = $region8
    $region5: #{tpu_custom_call.1} parent=1 // loop_body
      %s20 = ssub.s32 %s15, 1
      %s21 = ssub.s32 %s15, 2
      %s28 = sadd.s32 1, %s23
      %p29 = scmp.ge.s32.totalorder %s28, 2
      %s30 = scalar_select %p29, 0, %s28
      %s31 = sadd.s32 1, %s22
      %s32 = scalar_select %p29, %s31, %s22
      %p33 = scmp.ge.s32.totalorder %s32, 1
      %s34 = scalar_select %p33, 0, %s32
      %s35 = ssub.s32 %s23, %s30
      %p36 = scmp.eq.s32.totalorder %s35, 0
      %s38 = sadd.s32 %s37, 1
      %s39 = scalar_select %p36, %s37, %s38
      %p42 = pneg %p36
      %p43 = scmp.eq.s32.totalorder %s15, 1
      %p44 = por %p42, %p43
      %p45 = scmp.ne.s32.totalorder %s37, %s40
      %p46 = scmp.eq.s32.totalorder %s15, 0
      %p47 = por %p45, %p46
      %p48 = scmp.ne.s32.totalorder %s37, %s40
      %p49 = scmp.eq.s32.totalorder %s20, 1
      %p50 = por %p48, %p49
      %p51 = scmp.ne.s32.totalorder %s40, %s41
      %p52 = scmp.eq.s32.totalorder %s20, 0
      %p53 = por %p51, %p52
      %p54 = scmp.ne.s32.totalorder %s40, %s41
      %p55 = scmp.eq.s32.totalorder %s21, 1
      %p56 = por %p54, %p55
      %p58 = scmp.ne.s32.totalorder %s41, %s57
      %p59 = scmp.eq.s32.totalorder %s21, 0
      %p60 = por %p58, %p59
      %s61 = ssub.s32 %s22, %s34
      %p62 = scmp.eq.s32.totalorder %s61, 0
      %s64 = sadd.s32 %s63, 1
      %s65 = scalar_select %p62, %s63, %s64
      %p68 = pneg %p62
      %p69 = scmp.eq.s32.totalorder %s15, 1
      %p70 = por %p68, %p69
      %p71 = scmp.ne.s32.totalorder %s63, %s66
      %p72 = scmp.eq.s32.totalorder %s15, 0
      %p73 = por %p71, %p72
      %p74 = scmp.ne.s32.totalorder %s63, %s66
      %p75 = scmp.eq.s32.totalorder %s20, 1
      %p76 = por %p74, %p75
      %p77 = scmp.ne.s32.totalorder %s66, %s67
      %p78 = scmp.eq.s32.totalorder %s20, 0
      %p79 = por %p77, %p78
      %p80 = scmp.ne.s32.totalorder %s66, %s67
      %p81 = scmp.eq.s32.totalorder %s21, 1
      %p82 = por %p80, %p81
      %p84 = scmp.ne.s32.totalorder %s67, %s83
      %p85 = scmp.eq.s32.totalorder %s21, 0
      %p86 = por %p84, %p85
      %s87 = ssub.s32 %s22, %s34
      %s88 = ssub.s32 %s23, %s30
      %s89 = sor.u32 %s87, %s88
      %p90 = scmp.eq.s32.totalorder %s89, 0
      %s92 = sadd.s32 %s91, 1
      %s93 = scalar_select %p90, %s91, %s92
      %p96 = pneg %p90
      %p97 = scmp.eq.s32.totalorder %s15, 1
      %p98 = por %p96, %p97
      %p99 = scmp.ne.s32.totalorder %s91, %s94
      %p100 = scmp.eq.s32.totalorder %s15, 0
      %p101 = por %p99, %p100
      %p102 = scmp.ne.s32.totalorder %s91, %s94
      %p103 = scmp.eq.s32.totalorder %s20, 1
      %p104 = por %p102, %p103
      %p105 = scmp.ne.s32.totalorder %s94, %s95
      %p106 = scmp.eq.s32.totalorder %s20, 0
      %p107 = por %p105, %p106
      %p108 = scmp.ne.s32.totalorder %s94, %s95
      %p109 = scmp.eq.s32.totalorder %s21, 1
      %p110 = por %p108, %p109
      %p112 = scmp.ne.s32.totalorder %s95, %s111
      %p113 = scmp.eq.s32.totalorder %s21, 0
      %p114 = por %p112, %p113
      %p115 = scmp.le.s32.totalorder 1, %s15
      %p116 = scmp.lt.s32.totalorder %s15, 3
      %p117 = pnand %p115, %p116
      %p118 = pneg %p117
      // Predicated region
      $region9: #{tpu_custom_call.1} parent=5 // pred_check
        _
      $region10: #{tpu_custom_call.1} parent=5 // pred_check_branch
        %120 = sbr.rel (%p117) target = $region12
      $region11: #{tpu_custom_call.1} parent=5 // pred_region
        %s121 = ssub.s32 %s15, 1
        // Predicated region
        $region13: #{tpu_custom_call.1} parent=11 // pred_check
          %p122 = pneg %p79
        $region14: #{tpu_custom_call.1} parent=11 // pred_check_branch
          %124 = sbr.rel (%p122) target = $region16
        $region15: #{tpu_custom_call.1} parent=11 // pred_region
          %s125 = smul.u32 2, %s24
          %s127 = ssub.s32 256, 256
          %128 = vsyncadd [#allocation6], %s127
          %s129 = smul.addr %s125, 128
          %s130 = scalar_lea.hbm %s1, %s129
          %s131 = sshll.u32 [#allocation5], 4
          %s132 = int_to_ptr.vmem [resolvable:$true] %s131
          %137 = dma.hbm_to_vmem [thread:$0]  %s130, 256, %s132, [#allocation6], 128, 128, 8
        $region16: #{tpu_custom_call.1} parent=11 // pred_fallthru
          _
      $region12: #{tpu_custom_call.1} parent=5 // pred_fallthru
        _
      %p138 = scmp.lt.s32.totalorder %s15, 2
      // Predicated region
      $region17: #{tpu_custom_call.1} parent=5 // pred_check
        %p139 = pneg %p138
      $region18: #{tpu_custom_call.1} parent=5 // pred_check_branch
        %141 = sbr.rel (%p139) target = $region20
      $region19: #{tpu_custom_call.1} parent=5 // pred_region
        // Predicated region
        $region21: #{tpu_custom_call.1} parent=19 // pred_check
          %p142 = pneg %p47
        $region22: #{tpu_custom_call.1} parent=19 // pred_check_branch
          %144 = sbr.rel (%p142) target = $region24
        $region23: #{tpu_custom_call.1} parent=19 // pred_region
          %s145 = sand.u32 %s37, 1
          %s146 = scalar_lea.sflag [#allocation3], %s145
          %s147 = sand.u32 %s37, 1
          %s148 = smul.addr %s147, 8
          %s149 = scalar_lea.vmem [#allocation2], %s148
          %s151 = ssub.s32 128, 128
          %152 = vsyncadd %s146, %s151
          %s153 = smul.addr %s23, 128
          %s154 = scalar_lea.hbm %s0, %s153
          %s156 = sshll.u32 %s149, 4
          %s157 = int_to_ptr.vmem [resolvable:$true] %s156
          %159 = dma.hbm_to_vmem [thread:$0]  %s154, 128, %s157, %s146
        $region24: #{tpu_custom_call.1} parent=19 // pred_fallthru
          _
      $region20: #{tpu_custom_call.1} parent=5 // pred_fallthru
        _
      %p160 = scmp.le.s32.totalorder 1, %s15
      %p161 = scmp.lt.s32.totalorder %s15, 3
      %p162 = pnand %p160, %p161
      %p163 = pneg %p162
      // Predicated region
      $region25: #{tpu_custom_call.1} parent=5 // pred_check
        _
      $region26: #{tpu_custom_call.1} parent=5 // pred_check_branch
        %165 = sbr.rel (%p162) target = $region28
      $region27: #{tpu_custom_call.1} parent=5 // pred_region
        %s166 = ssub.s32 %s15, 1
        %s167 = sand.u32 %s40, 1
        %s168 = scalar_lea.sflag [#allocation3], %s167
        %s169 = sand.u32 %s40, 1
        %s170 = smul.addr %s169, 8
        %s171 = scalar_lea.vmem [#allocation2], %s170
        // Predicated region
        $region29: #{tpu_custom_call.1} parent=27 // pred_check
          %p172 = pneg %p53
        $region30: #{tpu_custom_call.1} parent=27 // pred_check_branch
          %174 = sbr.rel (%p172) target = $region32
        $region31: #{tpu_custom_call.1} parent=27 // pred_region
          %175 = dma.done %s168, 128
        $region32: #{tpu_custom_call.1} parent=27 // pred_fallthru
          _
        // Predicated region
        $region33: #{tpu_custom_call.1} parent=27 // pred_check
          %p176 = pneg %p79
        $region34: #{tpu_custom_call.1} parent=27 // pred_check_branch
          %178 = sbr.rel (%p176) target = $region36
        $region35: #{tpu_custom_call.1} parent=27 // pred_region
          %179 = dma.done [#allocation6], 256
        $region36: #{tpu_custom_call.1} parent=27 // pred_fallthru
          _
        %s180 = sand.u32 %s40, 1
        %s181 = scalar_lea.sflag [#allocation3], %s180
        %s182 = sand.u32 %s40, 1
        %s183 = smul.addr %s182, 8
        %s184 = scalar_lea.vmem [#allocation2], %s183
        %p185 = pneg %p53
        %p186 = pneg %p50
        %p187 = pneg %p79
        %p188 = pneg %p76
        %p189 = pneg %p107
        %p190 = pneg %p104
        %s191 = sand.u32 %s94, 1
        %s192 = scalar_lea.sflag [#allocation4], %s191
        %s193 = sand.u32 %s94, 1
        %s194 = smul.addr %s193, 16
        %s195 = scalar_lea.vmem [#allocation7], %s194
        %s196 = smul.u32 2, %s24
        %s197 = smul.u32 2, %s24
        %v198 = vld [vmem:[%s171] sm:$0xff]
        %v199 = vld [vmem:[#allocation5] sm:$0xff]
        %v200 = vld [vmem:[#allocation5 + $0x8] sm:$0xff]
        %202 = vset.pattern.permute.xlu0 8
        %203 = vperm.xlu0 %202, %v199
        %v204 = vpop.permute.xlu0 %203
        %207 = vset.pattern.permute.xlu0 8
        %208 = vperm.xlu0 %207, %v200
        %v209 = vpop.permute.xlu0 %208
        %v211 = vlaneseq
        %v212 = vshrl.u32 %v211, 7
        %v213 = vsub.s32 0, %v212
        %v214 = vrot.slane %v198, %v213
        %v215 = vmul.f32 %v204, %v214
        %v216 = vmul.f32 %v209, %v214
        %217 = vset.pattern.permute.xlu0 10
        %218 = vperm.xlu0 %217, %v199
        %v219 = vpop.permute.xlu0 %218
        %221 = vset.pattern.permute.xlu0 10
        %222 = vperm.xlu0 %221, %v200
        %v223 = vpop.permute.xlu0 %222
        %v225 = vadd.f32 %v215, %v219
        %v226 = vadd.f32 %v216, %v223
        %v227 = vand.u32 2147483647, %v225
        %vm228 = vcmp.le.f32.partialorder %v227, 0.7853982
        %vm229 = vcmp.lt.s32.totalorder %v225, 0
        %v230 = vand.u32 %v225, 2139095040
        %v231 = vshrl.u32 %v230, 23
        %v232 = vsub.s32 %v231, 127
        %v233 = vand.u32 2147483647, %v225
        %v234 = vand.u32 %v233, 8388607
        %v235 = vor.u32 %v234, 8388608
        %v236 = vsub.s32 0, %v235
        %v237 = vadd.s32 %v232, 1
        %vm238 = vcmp.gt.s32.totalorder %v237, 0
        %v239 = vsel %vm238, %v237, 0
        %v240 = vshrl.u32 %v239, 5
        %v241 = vand.u32 %v239, 31
        %v242 = vsub.s32 32, %v241
        %v243 = vshrl.u32 683565275, %v242
        %v244 = vshll.u32 683565275, %v241
        %v245 = vshrl.u32 2475754826, %v242
        %v246 = vor.u32 %v244, %v245
        %v247 = vshll.u32 2475754826, %v241
        %v248 = vshrl.u32 2131351028, %v242
        %v249 = vor.u32 %v247, %v248
        %v250 = vshll.u32 2131351028, %v241
        %v251 = vshrl.u32 2102212464, %v242
        %v252 = vor.u32 %v250, %v251
        %v253 = vshll.u32 2102212464, %v241
        %v254 = vshrl.u32 920167782, %v242
        %v255 = vor.u32 %v253, %v254
        %v256 = vshll.u32 920167782, %v241
        %v257 = vshrl.u32 1326507024, %v242
        %v258 = vor.u32 %v256, %v257
        %vm259 = vcmp.lt.s32.totalorder %v240, 1
        %vm260 = vcmp.lt.s32.totalorder %v240, 2
        %vm261 = vcmp.lt.s32.totalorder %v240, 3
        %vm262 = vcmp.lt.s32.totalorder %v240, 4
        %v263 = vsel %vm259, %v243, %v246
        %v264 = vsel %vm262, %v252, 2102212464
        %v265 = vsel %vm261, %v249, %v264
        %v266 = vsel %vm260, %v263, %v265
        %v267 = vsel %vm259, %v246, %v249
        %v268 = vsel %vm262, %v255, 920167782
        %v269 = vsel %vm261, %v252, %v268
        %v270 = vsel %vm260, %v267, %v269
        %v271 = vsel %vm259, %v249, %v252
        %v272 = vsel %vm262, %v258, 1326507024
        %v273 = vsel %vm261, %v255, %v272
        %v274 = vsel %vm260, %v271, %v273
        %v275 = vshll.u32 %v235, 8
        %v276 = vmul.u32.u64.compose %v275, %v274
        %v277 = vextract.low.u32 %v276
        %v278 = vextract.high.u32 %v276
        %v279 = vmul.u32.u64.compose %v275, %v270
        %v280 = vextract.low.u32 %v279
        %v281 = vextract.high.u32 %v279
        %v282 = vmul.u32 %v275, %v266
        %v283 = vadd.s32 %v278, %v280
        %vm284 = vc.u32 %v278, %v280
        %v285 = vadd.s32 %v281, 1
        %v286 = vsel %vm284, %v285, %v281
        %v287 = vadd.s32 %v282, %v286
        %v288 = vadd.s32 %v287, 536870912
        %v289 = vshrl.u32 %v288, 30
        %v290 = vshll.u32 %v289, 30
        %v291 = vsub.s32 %v287, %v290
        %vm292 = vcmp.lt.s32.totalorder %v291, 0
        %v293 = vsub.s32 0, %v291
        %v294 = vsel %vm292, %v293, %v291
        %v295 = vclz %v294
        %v296 = vsub.s32 %v295, 2
        %vm297 = vcmp.gt.s32.totalorder 0, %v296
        %v298 = vsel %vm297, 0, %v296
        %v299 = vsub.s32 32, %v298
        %v300 = vshll.u32 %v291, %v298
        %v301 = vshrl.u32 %v283, %v299
        %v302 = vor.u32 %v300, %v301
        %v303 = vsub.s32 4294967266, %v298
        %v304 = vadd.s32 %v303, 127
        %v305 = vshll.u32 %v304, 23
        %v306 = vor.u32 4788187, %v305
        %v307 = vand.u32 2147483647, %v306
        %v309 = vcvt.s32.f32 %v302
        %v310 = vmul.f32 %v309, %v307
        %v311 = vxor.u32 %v310, 2147483648
        %v312 = vsel %vm229, %v311, %v310
        %v313 = vsub.s32 4, %v289
        %v314 = vsel %vm229, %v313, %v289
        %v315 = vsel %vm228, %v225, %v312
        %v316 = vsel %vm228, 0, %v314
        %v317 = vcosq.f32.pop %v315
        %v318 = vsinq.f32.pop %v315
        %vm319 = vweird.f32 %v225
        %v320 = vadd.s32 %v316, 3
        %v321 = vand.u32 %v320, 3
        %vm322 = vcmp.lt.s32.totalorder %v321, 2
        %vm323 = vcmp.eq.s32.totalorder %v321, 0
        %v324 = vxor.u32 %v318, 2147483648
        %v325 = vsel %vm323, %v317, %v324
        %vm326 = vcmp.eq.s32.totalorder %v321, 2
        %v327 = vxor.u32 %v317, 2147483648
        %v328 = vsel %vm326, %v327, %v318
        %v329 = vsel %vm322, %v325, %v328
        %v330 = vsel %vm319, nan, %v329
        %v331 = vand.u32 2147483647, %v226
        %vm332 = vcmp.le.f32.partialorder %v331, 0.7853982
        %vm333 = vcmp.lt.s32.totalorder %v226, 0
        %v334 = vand.u32 %v226, 2139095040
        %v335 = vshrl.u32 %v334, 23
        %v336 = vsub.s32 %v335, 127
        %v337 = vand.u32 2147483647, %v226
        %v338 = vand.u32 %v337, 8388607
        %v339 = vor.u32 %v338, 8388608
        %v340 = vsub.s32 0, %v339
        %v341 = vadd.s32 %v336, 1
        %vm342 = vcmp.gt.s32.totalorder %v341, 0
        %v343 = vsel %vm342, %v341, 0
        %v344 = vshrl.u32 %v343, 5
        %v345 = vand.u32 %v343, 31
        %v346 = vsub.s32 32, %v345
        %v347 = vshrl.u32 683565275, %v346
        %v348 = vshll.u32 683565275, %v345
        %v349 = vshrl.u32 2475754826, %v346
        %v350 = vor.u32 %v348, %v349
        %v351 = vshll.u32 2475754826, %v345
        %v352 = vshrl.u32 2131351028, %v346
        %v353 = vor.u32 %v351, %v352
        %v354 = vshll.u32 2131351028, %v345
        %v355 = vshrl.u32 2102212464, %v346
        %v356 = vor.u32 %v354, %v355
        %v357 = vshll.u32 2102212464, %v345
        %v358 = vshrl.u32 920167782, %v346
        %v359 = vor.u32 %v357, %v358
        %v360 = vshll.u32 920167782, %v345
        %v361 = vshrl.u32 1326507024, %v346
        %v362 = vor.u32 %v360, %v361
        %vm363 = vcmp.lt.s32.totalorder %v344, 1
        %vm364 = vcmp.lt.s32.totalorder %v344, 2
        %vm365 = vcmp.lt.s32.totalorder %v344, 3
        %vm366 = vcmp.lt.s32.totalorder %v344, 4
        %v367 = vsel %vm363, %v347, %v350
        %v368 = vsel %vm366, %v356, 2102212464
        %v369 = vsel %vm365, %v353, %v368
        %v370 = vsel %vm364, %v367, %v369
        %v371 = vsel %vm363, %v350, %v353
        %v372 = vsel %vm366, %v359, 920167782
        %v373 = vsel %vm365, %v356, %v372
        %v374 = vsel %vm364, %v371, %v373
        %v375 = vsel %vm363, %v353, %v356
        %v376 = vsel %vm366, %v362, 1326507024
        %v377 = vsel %vm365, %v359, %v376
        %v378 = vsel %vm364, %v375, %v377
        %v379 = vshll.u32 %v339, 8
        %v380 = vmul.u32.u64.compose %v379, %v378
        %v381 = vextract.low.u32 %v380
        %v382 = vextract.high.u32 %v380
        %v383 = vmul.u32.u64.compose %v379, %v374
        %v384 = vextract.low.u32 %v383
        %v385 = vextract.high.u32 %v383
        %v386 = vmul.u32 %v379, %v370
        %v387 = vadd.s32 %v382, %v384
        %vm388 = vc.u32 %v382, %v384
        %v389 = vadd.s32 %v385, 1
        %v390 = vsel %vm388, %v389, %v385
        %v391 = vadd.s32 %v386, %v390
        %v392 = vadd.s32 %v391, 536870912
        %v393 = vshrl.u32 %v392, 30
        %v394 = vshll.u32 %v393, 30
        %v395 = vsub.s32 %v391, %v394
        %vm396 = vcmp.lt.s32.totalorder %v395, 0
        %v397 = vsub.s32 0, %v395
        %v398 = vsel %vm396, %v397, %v395
        %v399 = vclz %v398
        %v400 = vsub.s32 %v399, 2
        %vm401 = vcmp.gt.s32.totalorder 0, %v400
        %v402 = vsel %vm401, 0, %v400
        %v403 = vsub.s32 32, %v402
        %v404 = vshll.u32 %v395, %v402
        %v405 = vshrl.u32 %v387, %v403
        %v406 = vor.u32 %v404, %v405
        %v407 = vsub.s32 4294967266, %v402
        %v408 = vadd.s32 %v407, 127
        %v409 = vshll.u32 %v408, 23
        %v410 = vor.u32 4788187, %v409
        %v411 = vand.u32 2147483647, %v410
        %v413 = vcvt.s32.f32 %v406
        %v414 = vmul.f32 %v413, %v411
        %v415 = vxor.u32 %v414, 2147483648
        %v416 = vsel %vm333, %v415, %v414
        %v417 = vsub.s32 4, %v393
        %v418 = vsel %vm333, %v417, %v393
        %v419 = vsel %vm332, %v226, %v416
        %v420 = vsel %vm332, 0, %v418
        %v421 = vcosq.f32.pop %v419
        %v422 = vsinq.f32.pop %v419
        %vm423 = vweird.f32 %v226
        %v424 = vadd.s32 %v420, 3
        %v425 = vand.u32 %v424, 3
        %vm426 = vcmp.lt.s32.totalorder %v425, 2
        %vm427 = vcmp.eq.s32.totalorder %v425, 0
        %v428 = vxor.u32 %v422, 2147483648
        %v429 = vsel %vm427, %v421, %v428
        %vm430 = vcmp.eq.s32.totalorder %v425, 2
        %v431 = vxor.u32 %v421, 2147483648
        %v432 = vsel %vm430, %v431, %v422
        %v433 = vsel %vm426, %v429, %v432
        %v434 = vsel %vm423, nan, %v433
        %435 = vset.pattern.permute.xlu0 9
        %436 = vperm.xlu0 %435, %v199
        %v437 = vpop.permute.xlu0 %436
        %439 = vset.pattern.permute.xlu0 9
        %440 = vperm.xlu0 %439, %v200
        %v441 = vpop.permute.xlu0 %440
        %v443 = vmul.f32 %v437, %v330
        %v444 = vmul.f32 %v441, %v434
        %vm445 = vcmask 64512
        %v446 = vsel %vm445, %v199, 0
        %v448 = vsel %vm445, %v200, 0
        %450 = vmatprep.subr.mxu0 0.0
        %451 = vmatpush1.msra.mxu0 0.0
        %452 = vmatprep.subr.mxu0 0.0
        %453 = vmatpush1.msra.mxu0 0.0
        %454 = vmatprep.subr.mxu0 0.0
        %455 = vmatpush1.msra.mxu0 0.0
        %456 = vmatprep.subr.mxu0 0.0
        %457 = vmatpush1.msra.mxu0 0.0
        %458 = vmatprep.subr.mxu0 0.0
        %459 = vmatpush1.msra.mxu0 0.0
        %460 = vmatprep.subr.mxu0 0.0
        %461 = vmatpush1.msra.mxu0 0.0
        %462 = vmatprep.subr.mxu0 0.0
        %463 = vmatpush1.msra.mxu0 0.0
        %464 = vmatprep.subr.mxu0 0.0
        %465 = vmatpush1.msra.mxu0 0.0
        %466 = vmatprep.subr.mxu0 0.0
        %467 = vmatpush1.msra.mxu0 0.0
        %468 = vmatprep.subr.mxu0 0.0
        %469 = vmatpush1.msra.mxu0 0.0
        %470 = vmatprep.subr.mxu0 0.0
        %471 = vmatpush1.msra.mxu0 0.0
        %472 = vmatprep.subr.mxu0 0.0
        %473 = vmatpush1.msra.mxu0 0.0
        %474 = vmatprep.subr.mxu0 0.0
        %475 = vmatpush1.msra.mxu0 0.0
        %476 = vmatprep.subr.mxu0 0.0
        %477 = vmatpush1.msra.mxu0 0.0
        %478 = vmatprep.subr.mxu0 0.0
        %479 = vmatpush1.msra.mxu0 0.0
        %480 = vmatprep.subr.mxu0 0.0
        %481 = vmatpush1.msra.mxu0 %v198
        %482 = vmatprep.subr.mxu0 0.0
        %483 = vmatpush2.msra.mxu0 0.0
        %484 = vmatprep.subr.mxu0 0.0
        %485 = vmatpush2.msra.mxu0 0.0
        %486 = vmatprep.subr.mxu0 0.0
        %487 = vmatpush2.msra.mxu0 0.0
        %488 = vmatprep.subr.mxu0 0.0
        %489 = vmatpush2.msra.mxu0 0.0
        %490 = vmatprep.subr.mxu0 0.0
        %491 = vmatpush2.msra.mxu0 0.0
        %492 = vmatprep.subr.mxu0 0.0
        %493 = vmatpush2.msra.mxu0 0.0
        %494 = vmatprep.subr.mxu0 0.0
        %495 = vmatpush2.msra.mxu0 0.0
        %496 = vmatprep.subr.mxu0 0.0
        %497 = vmatpush2.msra.mxu0 0.0
        %498 = vmatprep.subr.mxu0 0.0
        %499 = vmatpush2.msra.mxu0 0.0
        %500 = vmatprep.subr.mxu0 0.0
        %501 = vmatpush2.msra.mxu0 0.0
        %502 = vmatprep.subr.mxu0 0.0
        %503 = vmatpush2.msra.mxu0 0.0
        %504 = vmatprep.subr.mxu0 0.0
        %505 = vmatpush2.msra.mxu0 0.0
        %506 = vmatprep.subr.mxu0 0.0
        %507 = vmatpush2.msra.mxu0 0.0
        %508 = vmatprep.subr.mxu0 0.0
        %509 = vmatpush2.msra.mxu0 0.0
        %510 = vmatprep.subr.mxu0 0.0
        %511 = vmatpush2.msra.mxu0 0.0
        %512 = vmatprep.subr.mxu0 0.0
        %513 = vmatpush2.msra.mxu0 0.0
        %514 = vmatprep.mubr.f32.mxu0 0.0
        %515 = vmatmul.mubr.f32.gmra.mxu0 %v446
        %v516 = vpop.f32.mrf.mxu0
        %v517 = vadd.f32 %v443, %v516
        %v518 = vpop.f32.mrf.mxu0
        %519 = vmatprep.mubr.f32.mxu0 0.0
        %520 = vmatmul.mubr.f32.gmra.mxu0 %v448
        %v521 = vpop.f32.mrf.mxu0
        %v522 = vadd.f32 %v444, %v521
        %v523 = vpop.f32.mrf.mxu0
        %524 = vdwg.mxu0
        %525 = vst [vmem:[%s195] sm:$0xff] %v517
        %526 = vst [vmem:[%s195 + $0x8] sm:$0xff] %v522
        %s527 = sand.u32 %s94, 1
        %s528 = scalar_lea.sflag [#allocation4], %s527
        %s529 = sand.u32 %s94, 1
        %s530 = smul.addr %s529, 16
        %s531 = scalar_lea.vmem [#allocation7], %s530
        // Predicated region
        $region37: #{tpu_custom_call.1} parent=27 // pred_check
          %p532 = pneg %p104
        $region38: #{tpu_custom_call.1} parent=27 // pred_check_branch
          %534 = sbr.rel (%p532) target = $region40
        $region39: #{tpu_custom_call.1} parent=27 // pred_region
          %s535 = smul.u32 2, %s24
          %s537 = ssub.s32 256, 256
          %538 = vsyncadd %s528, %s537
          %s539 = smul.addr %s535, 2
          %s540 = sadd.s32 %s25, %s539
          %s541 = smul.addr %s540, 128
          %s542 = scalar_lea.hbm %s2, %s541
          %s543 = sshll.u32 %s531, 4
          %s544 = int_to_ptr.vmem [resolvable:$true] %s543
          %549 = dma.vmem_to_hbm [thread:$0]  %s544, 256, %s542, %s528, 128, 256, 8
        $region40: #{tpu_custom_call.1} parent=27 // pred_fallthru
          _
      $region28: #{tpu_custom_call.1} parent=5 // pred_fallthru
        _
      %p550 = scmp.le.s32.totalorder 2, %s15
      // Predicated region
      $region41: #{tpu_custom_call.1} parent=5 // pred_check
        %p551 = pneg %p550
      $region42: #{tpu_custom_call.1} parent=5 // pred_check_branch
        %553 = sbr.rel (%p551) target = $region44
      $region43: #{tpu_custom_call.1} parent=5 // pred_region
        %s554 = ssub.s32 %s15, 2
        // Predicated region
        $region45: #{tpu_custom_call.1} parent=43 // pred_check
          %p555 = pneg %p110
        $region46: #{tpu_custom_call.1} parent=43 // pred_check_branch
          %557 = sbr.rel (%p555) target = $region48
        $region47: #{tpu_custom_call.1} parent=43 // pred_region
          %s558 = sand.u32 %s95, 1
          %s559 = scalar_lea.sflag [#allocation4], %s558
          %s560 = sand.u32 %s95, 1
          %s561 = smul.addr %s560, 16
          %s562 = scalar_lea.vmem [#allocation7], %s561
          %563 = dma.done %s559, 256
        $region48: #{tpu_custom_call.1} parent=43 // pred_fallthru
          _
      $region44: #{tpu_custom_call.1} parent=5 // pred_fallthru
        _
    $region6: #{tpu_custom_call.1} parent=1 // loop_footer
      %s19 = sadd.s32 1, %s15
    $region7: #{tpu_custom_call.1} parent=1 // loop_footer_branch
      %14 = sbr.rel target = $region3
    $region8: #{tpu_custom_call.1} parent=1 // loop_exit
      _
    %564 = vsyncpa [#allocation3], 1
    %s565 = scalar_lea.sflag [#allocation3], 1
    %566 = vsyncpa %s565, 1
    %567 = vsyncpa [#allocation6], 1
    %568 = vsyncpa [#allocation4], 1
    %s569 = scalar_lea.sflag [#allocation4], 1
    %570 = vsyncpa %s569, 1

</llo_original>
